<compile_context>
chip_gen: v5e
topology: v5e:2x2
jax: 0.10.0
libtpu: 0.0.40
codegen_flags: <defaults>
</compile_context>

<pallas_src>
import functools

import jax
import jax.numpy as jnp
import numpy as np
from jax.experimental import pallas as pl
from jax.experimental.pallas import tpu as pltpu


def mapping_kernel(z_ref, wh_ref, bh_ref, wo_ref, bo_ref, out_ref, *,
                   num_hidden, neg_slope, eps):
    # One batch tile per grid step; weights/biases resident in VMEM.
    compute_dtype = wh_ref.dtype                               # f32 or bf16
    z = z_ref[...].astype(jnp.float32)                         # [TB, D]

    # F.normalize(z, dim=1) == z / max(||z||_2, eps)
    norm = jnp.sqrt(jnp.sum(z * z, axis=1, keepdims=True))     # [TB, 1]
    x = z / jnp.maximum(norm, eps)

    # Hidden layers: y = x @ W + b (scale already folded into W), LeakyReLU.
    for l in range(num_hidden):                                # static unroll
        w = wh_ref[l]                                          # [D, D] (in, out)
        b = bh_ref[l]                                          # [1, D]
        y = jnp.dot(x.astype(compute_dtype), w,
                    preferred_element_type=jnp.float32) + b
        x = jnp.where(y > 0, y, neg_slope * y)

    # Output layer to style_num*D, LeakyReLU.
    w = wo_ref[...]                                            # [D, S*D]
    b = bo_ref[...]                                            # [1, S*D]
    y = jnp.dot(x.astype(compute_dtype), w,
                preferred_element_type=jnp.float32) + b
    x = jnp.where(y > 0, y, neg_slope * y)

    out_ref[...] = x.astype(out_ref.dtype)


def mapping_network(z, w_hidden, b_hidden, w_out, b_out, *, style_num, style_dim,
                    block_batch=256, use_bf16_matmul=False):
    batch = z.shape[0]
    D = style_dim
    L = w_hidden.shape[0]
    S = style_num
    scale = 1.0 / float(D) ** 0.5          # fan_in = style_dim for every layer

    # --- one-time parameter plumbing (outside the kernel) ---
    # PyTorch stores W as [out, in]; transpose to [in, out] and fold the
    # equalized-LR scale into the weights (NOT the biases).
    wh = jnp.swapaxes(w_hidden, 1, 2) * scale      # [L, D, D]   (in, out)
    wo = w_out.T * scale                           # [D, S*D]
    bh = b_hidden.reshape(L, 1, D)
    bo = b_out.reshape(1, S * D)
    if use_bf16_matmul:
        wh = wh.astype(jnp.bfloat16)
        wo = wo.astype(jnp.bfloat16)

    # --- batch tiling: multiple of 8 sublanes, capped at block_batch ---
    tb = min(block_batch, ((batch + 7) // 8) * 8)
    tb = max(8, (tb // 8) * 8)
    padded = pl.cdiv(batch, tb) * tb
    if padded != batch:
        z_in = jnp.zeros((padded, D), z.dtype).at[:batch].set(z)
    else:
        z_in = z
    grid = (padded // tb,)

    kernel = functools.partial(mapping_kernel,
                               num_hidden=L, neg_slope=0.2, eps=1e-12)

    out = pl.pallas_call(
        kernel,
        out_shape=jax.ShapeDtypeStruct((padded, S * D), jnp.float32),
        grid_spec=pltpu.PrefetchScalarGridSpec(
            num_scalar_prefetch=0,
            grid=grid,
            in_specs=[
                # activations: tiled over batch
                pl.BlockSpec((tb, D), lambda i: (i, 0)),
                # weights / biases: constant block index -> VMEM-resident
                pl.BlockSpec((L, D, D), lambda i: (0, 0, 0)),
                pl.BlockSpec((L, 1, D), lambda i: (0, 0, 0)),
                pl.BlockSpec((D, S * D), lambda i: (0, 0)),
                pl.BlockSpec((1, S * D), lambda i: (0, 0)),
            ],
            out_specs=pl.BlockSpec((tb, S * D), lambda i: (i, 0)),
        ),
        compiler_params=pltpu.CompilerParams(
            dimension_semantics=("parallel",),   # shards batch tiles on v7x
        ),
    )(z_in, wh, bh, wo, bo)

    return out[:batch].reshape(batch, S, D)


def reference_forward(z, w_hidden, b_hidden, w_out, b_out, *, style_num, style_dim):
    # Pure-JAX reference mirroring the PyTorch forward (original layout).
    scale = 1.0 / float(style_dim) ** 0.5
    norm = jnp.sqrt(jnp.sum(z * z, axis=1, keepdims=True))
    x = z / jnp.maximum(norm, 1e-12)
    for l in range(w_hidden.shape[0]):
        y = x @ w_hidden[l].T * scale + b_hidden[l]
        x = jnp.where(y > 0, y, 0.2 * y)
    y = x @ w_out.T * scale + b_out
    x = jnp.where(y > 0, y, 0.2 * y)
    return x.reshape(-1, style_num, style_dim)


if __name__ == "__main__":
    style_dim = 32
    style_num = 8
    mlp_layers_num = 8
    batch = 4

    key = jax.random.PRNGKey(0)
    k_z, k_wh, k_wo = jax.random.split(key, 3)

    # EqualizedLinear init: weight ~ N(0, 1), bias = 0 (scale applied at forward).
    z = jax.random.normal(k_z, (batch, style_dim), dtype=jnp.float32)
    w_hidden = jax.random.normal(k_wh, (mlp_layers_num, style_dim, style_dim),
                                 dtype=jnp.float32)
    b_hidden = jnp.zeros((mlp_layers_num, 1, style_dim), dtype=jnp.float32)
    w_out = jax.random.normal(k_wo, (style_num * style_dim, style_dim),
                              dtype=jnp.float32)
    b_out = jnp.zeros((1, style_num * style_dim), dtype=jnp.float32)

    out = mapping_network(z, w_hidden, b_hidden, w_out, b_out,
                          style_num=style_num, style_dim=style_dim)
    out = jax.block_until_ready(out)

    ref = reference_forward(z, w_hidden, b_hidden, w_out, b_out,
                            style_num=style_num, style_dim=style_dim)
    assert out.shape == (batch, style_num, style_dim)
    assert np.allclose(np.asarray(out), np.asarray(ref), rtol=1e-5, atol=1e-5)

    print("KERNEL_OK")
</pallas_src>

<mosaic_0001>
module attributes {stable_mosaic.version = 11 : i64} {
  func.func @mapping_kernel(%arg0: i32, %arg1: memref<8x32xf32, #tpu.memory_space<vmem>>, %arg2: memref<8x32x32xf32, #tpu.memory_space<vmem>>, %arg3: memref<8x1x32xf32, #tpu.memory_space<vmem>>, %arg4: memref<32x256xf32, #tpu.memory_space<vmem>>, %arg5: memref<1x256xf32, #tpu.memory_space<vmem>>, %arg6: memref<8x256xf32, #tpu.memory_space<vmem>>) attributes {dimension_semantics = [#tpu.dimension_semantics<parallel>], iteration_bounds = array<i64: 1>, scalar_prefetch = 0 : i64, scratch_operands = 0 : i64, tpu.core_type = #tpu.core_type<tc>, window_params = [{transform_indices = @transform_0, window_bounds = array<i64: 8, 32>}, {pipeline_mode = #tpu.pipeline_mode<synchronous>, transform_indices = @transform_1, window_bounds = array<i64: 8, 32, 32>}, {pipeline_mode = #tpu.pipeline_mode<synchronous>, transform_indices = @transform_2, window_bounds = array<i64: 8, 1, 32>}, {pipeline_mode = #tpu.pipeline_mode<synchronous>, transform_indices = @transform_3, window_bounds = array<i64: 32, 256>}, {pipeline_mode = #tpu.pipeline_mode<synchronous>, transform_indices = @transform_4, window_bounds = array<i64: 1, 256>}, {transform_indices = @transform_5, window_bounds = array<i64: 8, 256>}]} {
    %c0 = arith.constant 0 : index
    %c0_0 = arith.constant 0 : index
    %0 = vector.load %arg1[%c0, %c0_0] : memref<8x32xf32, #tpu.memory_space<vmem>>, vector<8x32xf32>
    %1 = arith.mulf %0, %0 : vector<8x32xf32>
    %cst = arith.constant dense<0.000000e+00> : vector<8xf32>
    %2 = vector.multi_reduction <add>, %1, %cst [1] : vector<8x32xf32> to vector<8xf32>
    %3 = vector.shape_cast %2 : vector<8xf32> to vector<8x1xf32>
    %4 = math.sqrt %3 : vector<8x1xf32>
    %cst_1 = arith.constant 9.99999996E-13 : f32
    %5 = vector.broadcast %cst_1 : f32 to vector<8x1xf32>
    %6 = arith.maximumf %4, %5 : vector<8x1xf32>
    %7 = vector.broadcast %6 : vector<8x1xf32> to vector<8x32xf32>
    %8 = arith.divf %0, %7 : vector<8x32xf32>
    %c0_2 = arith.constant 0 : index
    %c0_3 = arith.constant 0 : index
    %c0_4 = arith.constant 0 : index
    %9 = vector.load %arg2[%c0_2, %c0_3, %c0_4] : memref<8x32x32xf32, #tpu.memory_space<vmem>>, vector<1x32x32xf32>
    %10 = vector.shape_cast %9 : vector<1x32x32xf32> to vector<32x32xf32>
    %c0_5 = arith.constant 0 : index
    %c0_6 = arith.constant 0 : index
    %c0_7 = arith.constant 0 : index
    %11 = vector.load %arg3[%c0_5, %c0_6, %c0_7] : memref<8x1x32xf32, #tpu.memory_space<vmem>>, vector<1x1x32xf32>
    %12 = vector.shape_cast %11 : vector<1x1x32xf32> to vector<1x32xf32>
    %cst_8 = arith.constant dense<0.000000e+00> : vector<8x32xf32>
    %13 = tpu.matmul %8, %10, %cst_8 {dimension_numbers = #tpu.dot_dimension_numbers<[1], [0], [0], [1], [0, 0, 1, 1], [], []>} : vector<8x32xf32>, vector<32x32xf32>, vector<8x32xf32> -> vector<8x32xf32>
    %14 = vector.broadcast %12 : vector<1x32xf32> to vector<8x32xf32>
    %15 = arith.addf %13, %14 : vector<8x32xf32>
    %cst_9 = arith.constant 0.000000e+00 : f32
    %16 = vector.broadcast %cst_9 : f32 to vector<8x32xf32>
    %17 = arith.cmpf ogt, %15, %16 : vector<8x32xf32>
    %cst_10 = arith.constant 2.000000e-01 : f32
    %18 = vector.broadcast %cst_10 : f32 to vector<8x32xf32>
    %19 = arith.mulf %18, %15 : vector<8x32xf32>
    %20 = arith.select %17, %15, %19 : vector<8x32xi1>, vector<8x32xf32>
    %c1 = arith.constant 1 : index
    %c0_11 = arith.constant 0 : index
    %c0_12 = arith.constant 0 : index
    %21 = vector.load %arg2[%c1, %c0_11, %c0_12] : memref<8x32x32xf32, #tpu.memory_space<vmem>>, vector<1x32x32xf32>
    %22 = vector.shape_cast %21 : vector<1x32x32xf32> to vector<32x32xf32>
    %c1_13 = arith.constant 1 : index
    %c0_14 = arith.constant 0 : index
    %c0_15 = arith.constant 0 : index
    %23 = vector.load %arg3[%c1_13, %c0_14, %c0_15] : memref<8x1x32xf32, #tpu.memory_space<vmem>>, vector<1x1x32xf32>
    %24 = vector.shape_cast %23 : vector<1x1x32xf32> to vector<1x32xf32>
    %cst_16 = arith.constant dense<0.000000e+00> : vector<8x32xf32>
    %25 = tpu.matmul %20, %22, %cst_16 {dimension_numbers = #tpu.dot_dimension_numbers<[1], [0], [0], [1], [0, 0, 1, 1], [], []>} : vector<8x32xf32>, vector<32x32xf32>, vector<8x32xf32> -> vector<8x32xf32>
    %26 = vector.broadcast %24 : vector<1x32xf32> to vector<8x32xf32>
    %27 = arith.addf %25, %26 : vector<8x32xf32>
    %cst_17 = arith.constant 0.000000e+00 : f32
    %28 = vector.broadcast %cst_17 : f32 to vector<8x32xf32>
    %29 = arith.cmpf ogt, %27, %28 : vector<8x32xf32>
    %cst_18 = arith.constant 2.000000e-01 : f32
    %30 = vector.broadcast %cst_18 : f32 to vector<8x32xf32>
    %31 = arith.mulf %30, %27 : vector<8x32xf32>
    %32 = arith.select %29, %27, %31 : vector<8x32xi1>, vector<8x32xf32>
    %c2 = arith.constant 2 : index
    %c0_19 = arith.constant 0 : index
    %c0_20 = arith.constant 0 : index
    %33 = vector.load %arg2[%c2, %c0_19, %c0_20] : memref<8x32x32xf32, #tpu.memory_space<vmem>>, vector<1x32x32xf32>
    %34 = vector.shape_cast %33 : vector<1x32x32xf32> to vector<32x32xf32>
    %c2_21 = arith.constant 2 : index
    %c0_22 = arith.constant 0 : index
    %c0_23 = arith.constant 0 : index
    %35 = vector.load %arg3[%c2_21, %c0_22, %c0_23] : memref<8x1x32xf32, #tpu.memory_space<vmem>>, vector<1x1x32xf32>
    %36 = vector.shape_cast %35 : vector<1x1x32xf32> to vector<1x32xf32>
    %cst_24 = arith.constant dense<0.000000e+00> : vector<8x32xf32>
    %37 = tpu.matmul %32, %34, %cst_24 {dimension_numbers = #tpu.dot_dimension_numbers<[1], [0], [0], [1], [0, 0, 1, 1], [], []>} : vector<8x32xf32>, vector<32x32xf32>, vector<8x32xf32> -> vector<8x32xf32>
    %38 = vector.broadcast %36 : vector<1x32xf32> to vector<8x32xf32>
    %39 = arith.addf %37, %38 : vector<8x32xf32>
    %cst_25 = arith.constant 0.000000e+00 : f32
    %40 = vector.broadcast %cst_25 : f32 to vector<8x32xf32>
    %41 = arith.cmpf ogt, %39, %40 : vector<8x32xf32>
    %cst_26 = arith.constant 2.000000e-01 : f32
    %42 = vector.broadcast %cst_26 : f32 to vector<8x32xf32>
    %43 = arith.mulf %42, %39 : vector<8x32xf32>
    %44 = arith.select %41, %39, %43 : vector<8x32xi1>, vector<8x32xf32>
    %c3 = arith.constant 3 : index
    %c0_27 = arith.constant 0 : index
    %c0_28 = arith.constant 0 : index
    %45 = vector.load %arg2[%c3, %c0_27, %c0_28] : memref<8x32x32xf32, #tpu.memory_space<vmem>>, vector<1x32x32xf32>
    %46 = vector.shape_cast %45 : vector<1x32x32xf32> to vector<32x32xf32>
    %c3_29 = arith.constant 3 : index
    %c0_30 = arith.constant 0 : index
    %c0_31 = arith.constant 0 : index
    %47 = vector.load %arg3[%c3_29, %c0_30, %c0_31] : memref<8x1x32xf32, #tpu.memory_space<vmem>>, vector<1x1x32xf32>
    %48 = vector.shape_cast %47 : vector<1x1x32xf32> to vector<1x32xf32>
    %cst_32 = arith.constant dense<0.000000e+00> : vector<8x32xf32>
    %49 = tpu.matmul %44, %46, %cst_32 {dimension_numbers = #tpu.dot_dimension_numbers<[1], [0], [0], [1], [0, 0, 1, 1], [], []>} : vector<8x32xf32>, vector<32x32xf32>, vector<8x32xf32> -> vector<8x32xf32>
    %50 = vector.broadcast %48 : vector<1x32xf32> to vector<8x32xf32>
    %51 = arith.addf %49, %50 : vector<8x32xf32>
    %cst_33 = arith.constant 0.000000e+00 : f32
    %52 = vector.broadcast %cst_33 : f32 to vector<8x32xf32>
    %53 = arith.cmpf ogt, %51, %52 : vector<8x32xf32>
    %cst_34 = arith.constant 2.000000e-01 : f32
    %54 = vector.broadcast %cst_34 : f32 to vector<8x32xf32>
    %55 = arith.mulf %54, %51 : vector<8x32xf32>
    %56 = arith.select %53, %51, %55 : vector<8x32xi1>, vector<8x32xf32>
    %c4 = arith.constant 4 : index
    %c0_35 = arith.constant 0 : index
    %c0_36 = arith.constant 0 : index
    %57 = vector.load %arg2[%c4, %c0_35, %c0_36] : memref<8x32x32xf32, #tpu.memory_space<vmem>>, vector<1x32x32xf32>
    %58 = vector.shape_cast %57 : vector<1x32x32xf32> to vector<32x32xf32>
    %c4_37 = arith.constant 4 : index
    %c0_38 = arith.constant 0 : index
    %c0_39 = arith.constant 0 : index
    %59 = vector.load %arg3[%c4_37, %c0_38, %c0_39] : memref<8x1x32xf32, #tpu.memory_space<vmem>>, vector<1x1x32xf32>
    %60 = vector.shape_cast %59 : vector<1x1x32xf32> to vector<1x32xf32>
    %cst_40 = arith.constant dense<0.000000e+00> : vector<8x32xf32>
    %61 = tpu.matmul %56, %58, %cst_40 {dimension_numbers = #tpu.dot_dimension_numbers<[1], [0], [0], [1], [0, 0, 1, 1], [], []>} : vector<8x32xf32>, vector<32x32xf32>, vector<8x32xf32> -> vector<8x32xf32>
    %62 = vector.broadcast %60 : vector<1x32xf32> to vector<8x32xf32>
    %63 = arith.addf %61, %62 : vector<8x32xf32>
    %cst_41 = arith.constant 0.000000e+00 : f32
    %64 = vector.broadcast %cst_41 : f32 to vector<8x32xf32>
    %65 = arith.cmpf ogt, %63, %64 : vector<8x32xf32>
    %cst_42 = arith.constant 2.000000e-01 : f32
    %66 = vector.broadcast %cst_42 : f32 to vector<8x32xf32>
    %67 = arith.mulf %66, %63 : vector<8x32xf32>
    %68 = arith.select %65, %63, %67 : vector<8x32xi1>, vector<8x32xf32>
    %c5 = arith.constant 5 : index
    %c0_43 = arith.constant 0 : index
    %c0_44 = arith.constant 0 : index
    %69 = vector.load %arg2[%c5, %c0_43, %c0_44] : memref<8x32x32xf32, #tpu.memory_space<vmem>>, vector<1x32x32xf32>
    %70 = vector.shape_cast %69 : vector<1x32x32xf32> to vector<32x32xf32>
    %c5_45 = arith.constant 5 : index
    %c0_46 = arith.constant 0 : index
    %c0_47 = arith.constant 0 : index
    %71 = vector.load %arg3[%c5_45, %c0_46, %c0_47] : memref<8x1x32xf32, #tpu.memory_space<vmem>>, vector<1x1x32xf32>
    %72 = vector.shape_cast %71 : vector<1x1x32xf32> to vector<1x32xf32>
    %cst_48 = arith.constant dense<0.000000e+00> : vector<8x32xf32>
    %73 = tpu.matmul %68, %70, %cst_48 {dimension_numbers = #tpu.dot_dimension_numbers<[1], [0], [0], [1], [0, 0, 1, 1], [], []>} : vector<8x32xf32>, vector<32x32xf32>, vector<8x32xf32> -> vector<8x32xf32>
    %74 = vector.broadcast %72 : vector<1x32xf32> to vector<8x32xf32>
    %75 = arith.addf %73, %74 : vector<8x32xf32>
    %cst_49 = arith.constant 0.000000e+00 : f32
    %76 = vector.broadcast %cst_49 : f32 to vector<8x32xf32>
    %77 = arith.cmpf ogt, %75, %76 : vector<8x32xf32>
    %cst_50 = arith.constant 2.000000e-01 : f32
    %78 = vector.broadcast %cst_50 : f32 to vector<8x32xf32>
    %79 = arith.mulf %78, %75 : vector<8x32xf32>
    %80 = arith.select %77, %75, %79 : vector<8x32xi1>, vector<8x32xf32>
    %c6 = arith.constant 6 : index
    %c0_51 = arith.constant 0 : index
    %c0_52 = arith.constant 0 : index
    %81 = vector.load %arg2[%c6, %c0_51, %c0_52] : memref<8x32x32xf32, #tpu.memory_space<vmem>>, vector<1x32x32xf32>
    %82 = vector.shape_cast %81 : vector<1x32x32xf32> to vector<32x32xf32>
    %c6_53 = arith.constant 6 : index
    %c0_54 = arith.constant 0 : index
    %c0_55 = arith.constant 0 : index
    %83 = vector.load %arg3[%c6_53, %c0_54, %c0_55] : memref<8x1x32xf32, #tpu.memory_space<vmem>>, vector<1x1x32xf32>
    %84 = vector.shape_cast %83 : vector<1x1x32xf32> to vector<1x32xf32>
    %cst_56 = arith.constant dense<0.000000e+00> : vector<8x32xf32>
    %85 = tpu.matmul %80, %82, %cst_56 {dimension_numbers = #tpu.dot_dimension_numbers<[1], [0], [0], [1], [0, 0, 1, 1], [], []>} : vector<8x32xf32>, vector<32x32xf32>, vector<8x32xf32> -> vector<8x32xf32>
    %86 = vector.broadcast %84 : vector<1x32xf32> to vector<8x32xf32>
    %87 = arith.addf %85, %86 : vector<8x32xf32>
    %cst_57 = arith.constant 0.000000e+00 : f32
    %88 = vector.broadcast %cst_57 : f32 to vector<8x32xf32>
    %89 = arith.cmpf ogt, %87, %88 : vector<8x32xf32>
    %cst_58 = arith.constant 2.000000e-01 : f32
    %90 = vector.broadcast %cst_58 : f32 to vector<8x32xf32>
    %91 = arith.mulf %90, %87 : vector<8x32xf32>
    %92 = arith.select %89, %87, %91 : vector<8x32xi1>, vector<8x32xf32>
    %c7 = arith.constant 7 : index
    %c0_59 = arith.constant 0 : index
    %c0_60 = arith.constant 0 : index
    %93 = vector.load %arg2[%c7, %c0_59, %c0_60] : memref<8x32x32xf32, #tpu.memory_space<vmem>>, vector<1x32x32xf32>
    %94 = vector.shape_cast %93 : vector<1x32x32xf32> to vector<32x32xf32>
    %c7_61 = arith.constant 7 : index
    %c0_62 = arith.constant 0 : index
    %c0_63 = arith.constant 0 : index
    %95 = vector.load %arg3[%c7_61, %c0_62, %c0_63] : memref<8x1x32xf32, #tpu.memory_space<vmem>>, vector<1x1x32xf32>
    %96 = vector.shape_cast %95 : vector<1x1x32xf32> to vector<1x32xf32>
    %cst_64 = arith.constant dense<0.000000e+00> : vector<8x32xf32>
    %97 = tpu.matmul %92, %94, %cst_64 {dimension_numbers = #tpu.dot_dimension_numbers<[1], [0], [0], [1], [0, 0, 1, 1], [], []>} : vector<8x32xf32>, vector<32x32xf32>, vector<8x32xf32> -> vector<8x32xf32>
    %98 = vector.broadcast %96 : vector<1x32xf32> to vector<8x32xf32>
    %99 = arith.addf %97, %98 : vector<8x32xf32>
    %cst_65 = arith.constant 0.000000e+00 : f32
    %100 = vector.broadcast %cst_65 : f32 to vector<8x32xf32>
    %101 = arith.cmpf ogt, %99, %100 : vector<8x32xf32>
    %cst_66 = arith.constant 2.000000e-01 : f32
    %102 = vector.broadcast %cst_66 : f32 to vector<8x32xf32>
    %103 = arith.mulf %102, %99 : vector<8x32xf32>
    %104 = arith.select %101, %99, %103 : vector<8x32xi1>, vector<8x32xf32>
    %c0_67 = arith.constant 0 : index
    %c0_68 = arith.constant 0 : index
    %105 = vector.load %arg4[%c0_67, %c0_68] : memref<32x256xf32, #tpu.memory_space<vmem>>, vector<32x256xf32>
    %c0_69 = arith.constant 0 : index
    %c0_70 = arith.constant 0 : index
    %106 = vector.load %arg5[%c0_69, %c0_70] : memref<1x256xf32, #tpu.memory_space<vmem>>, vector<1x256xf32>
    %cst_71 = arith.constant dense<0.000000e+00> : vector<8x256xf32>
    %107 = tpu.matmul %104, %105, %cst_71 {dimension_numbers = #tpu.dot_dimension_numbers<[1], [0], [0], [1], [0, 0, 1, 1], [], []>} : vector<8x32xf32>, vector<32x256xf32>, vector<8x256xf32> -> vector<8x256xf32>
    %108 = vector.broadcast %106 : vector<1x256xf32> to vector<8x256xf32>
    %109 = arith.addf %107, %108 : vector<8x256xf32>
    %cst_72 = arith.constant 0.000000e+00 : f32
    %110 = vector.broadcast %cst_72 : f32 to vector<8x256xf32>
    %111 = arith.cmpf ogt, %109, %110 : vector<8x256xf32>
    %cst_73 = arith.constant 2.000000e-01 : f32
    %112 = vector.broadcast %cst_73 : f32 to vector<8x256xf32>
    %113 = arith.mulf %112, %109 : vector<8x256xf32>
    %114 = arith.select %111, %109, %113 : vector<8x256xi1>, vector<8x256xf32>
    %c0_74 = arith.constant 0 : index
    %c0_75 = arith.constant 0 : index
    %115 = vector.load %arg6[%c0_74, %c0_75] : memref<8x256xf32, #tpu.memory_space<vmem>>, vector<8x256xf32>
    tpu.vector_store %arg6[%c0_74, %c0_75], %114 {strides = array<i32>} : memref<8x256xf32, #tpu.memory_space<vmem>>, vector<8x256xf32>,
    return
  }
  func.func @transform_0(%arg0: i32) -> (i32, i32) {
    %c0_i32 = arith.constant 0 : i32
    %c0_i32_0 = arith.constant 0 : i32
    return %arg0, %c0_i32 : i32, i32
  }
  func.func @transform_1(%arg0: i32) -> (i32, i32, i32) {
    %c0_i32 = arith.constant 0 : i32
    %c0_i32_0 = arith.constant 0 : i32
    %c0_i32_1 = arith.constant 0 : i32
    %c0_i32_2 = arith.constant 0 : i32
    return %c0_i32, %c0_i32_0, %c0_i32_1 : i32, i32, i32
  }
  func.func @transform_2(%arg0: i32) -> (i32, i32, i32) {
    %c0_i32 = arith.constant 0 : i32
    %c0_i32_0 = arith.constant 0 : i32
    %c0_i32_1 = arith.constant 0 : i32
    %c0_i32_2 = arith.constant 0 : i32
    return %c0_i32, %c0_i32_0, %c0_i32_1 : i32, i32, i32
  }
  func.func @transform_3(%arg0: i32) -> (i32, i32) {
    %c0_i32 = arith.constant 0 : i32
    %c0_i32_0 = arith.constant 0 : i32
    %c0_i32_1 = arith.constant 0 : i32
    return %c0_i32, %c0_i32_0 : i32, i32
  }
  func.func @transform_4(%arg0: i32) -> (i32, i32) {
    %c0_i32 = arith.constant 0 : i32
    %c0_i32_0 = arith.constant 0 : i32
    %c0_i32_1 = arith.constant 0 : i32
    return %c0_i32, %c0_i32_0 : i32, i32
  }
  func.func @transform_5(%arg0: i32) -> (i32, i32) {
    %c0_i32 = arith.constant 0 : i32
    %c0_i32_0 = arith.constant 0 : i32
    return %arg0, %c0_i32 : i32, i32
  }
}

</mosaic_0001>

<llo_original>
// kernel: tpu_custom_call.1
$region0: #{tpu_custom_call.1}
  #allocation0 [shape = 'u32[]', space=smem, size = 0x4, offset = 0x4, fixed_abs, tag = 'smem constant byte address 0x4 - core index']
  #allocation1 [shape = 'u32[72,128]{1,0:T(1,128)}', space=vmem, size = 0x9000, scoped, tag = 'internal scratch']
  %s0 = inlined_call_operand.hbm [shape: f32[8,32], index: 0, kind: input, shape index: {}]
  %s1 = inlined_call_operand.hbm [shape: f32[8,32,32], index: 1, kind: input, shape index: {}]
  %s2 = inlined_call_operand.hbm [shape: f32[8,1,32], index: 2, kind: input, shape index: {}]
  %s3 = inlined_call_operand.hbm [shape: f32[32,256], index: 3, kind: input, shape index: {}]
  %s4 = inlined_call_operand.vmem [shape: f32[1,256], index: 4, kind: input, shape index: {}]
  %s5 = inlined_call_operand.hbm [shape: f32[8,256], index: 5, kind: output, shape index: {}]
  %s6 = sld [smem:[#allocation0]]
  $region46: #{tpu_custom_call.1} parent=0
    _
  %s8 = ssub.s32 1, %s6
  %s9 = scalar_select 0, %s8, %s6
  $region1: #{tpu_custom_call.1} parent=0
    #allocation2 [shape = 'u8[4096]{0}', space=vmem, size = 0x1000, scoped, tag = 'input window, operand 0, single buffered']
    #allocation3 [shape = 's32[1]{0}', space=sflag, size = 0x4, scoped, tag = 'scoped memory for tpu_custom_call.1']
    #allocation4 [shape = 's32[1]{0}', space=sflag, size = 0x4, scoped, tag = 'scoped memory for tpu_custom_call.1']
    #allocation5 [shape = 'u8[131072]{0}', space=vmem, size = 0x20000, scoped, tag = 'input window, operand 1, single buffered']
    #allocation6 [shape = 's32[1]{0}', space=sflag, size = 0x4, scoped, tag = 'scoped memory for tpu_custom_call.1']
    #allocation7 [shape = 'u8[4096]{0}', space=vmem, size = 0x1000, scoped, tag = 'input window, operand 2, single buffered']
    #allocation8 [shape = 'u8[32768]{0}', space=vmem, size = 0x8000, scoped, tag = 'input window, operand 3, single buffered']
    #allocation9 [shape = 's32[1]{0}', space=sflag, size = 0x4, scoped, tag = 'scoped memory for tpu_custom_call.1']
    #allocation10 [shape = 'u8[8192]{0}', space=vmem, size = 0x2000, scoped, tag = 'output window, operand 0, single buffered']
    %10 = vsyncpa [#allocation3], 0
    %11 = vsyncpa [#allocation6], 0
    %12 = vsyncpa [#allocation9], 0
    %13 = vsyncpa [#allocation4], 0
    // Predicated region
    $region2: #{tpu_custom_call.1} parent=1 // pred_check
      _
    $region3: #{tpu_custom_call.1} parent=1 // pred_check_branch
      %15 = sbr.rel (0) target = $region5
    $region4: #{tpu_custom_call.1} parent=1 // pred_region
      %17 = vsyncadd [#allocation3], 0
      %s19 = sshll.u32 %s0, 4
      %s20 = int_to_ptr.hbm [resolvable:$true] %s19
      %s21 = sshll.u32 [#allocation2], 4
      %s22 = int_to_ptr.vmem [resolvable:$true] %s21
      %24 = dma.hbm_to_vmem [thread:$0]  %s20, 128, %s22, [#allocation3]
    $region5: #{tpu_custom_call.1} parent=1 // pred_fallthru
      _
    // Predicated region
    $region6: #{tpu_custom_call.1} parent=1 // pred_check
      _
    $region7: #{tpu_custom_call.1} parent=1 // pred_check_branch
      %26 = sbr.rel (0) target = $region9
    $region8: #{tpu_custom_call.1} parent=1 // pred_region
      %28 = vsyncadd [#allocation6], 0
      %s29 = sshll.u32 %s1, 4
      %s30 = int_to_ptr.hbm [resolvable:$true] %s29
      %s31 = sshll.u32 [#allocation5], 4
      %s32 = int_to_ptr.vmem [resolvable:$true] %s31
      %37 = dma.hbm_to_vmem [thread:$0]  %s30, 4096, %s32, [#allocation6], 128, 128, 8
    $region9: #{tpu_custom_call.1} parent=1 // pred_fallthru
      _
    // Predicated region
    $region10: #{tpu_custom_call.1} parent=1 // pred_check
      _
    $region11: #{tpu_custom_call.1} parent=1 // pred_check_branch
      %39 = sbr.rel (0) target = $region13
    $region12: #{tpu_custom_call.1} parent=1 // pred_region
      %41 = vsyncadd [#allocation6], 0
      %s42 = sshll.u32 %s2, 4
      %s43 = int_to_ptr.hbm [resolvable:$true] %s42
      %s44 = sshll.u32 [#allocation7], 4
      %s45 = int_to_ptr.vmem [resolvable:$true] %s44
      %50 = dma.hbm_to_vmem [thread:$0]  %s43, 128, %s45, [#allocation6], 16, 16, 1
    $region13: #{tpu_custom_call.1} parent=1 // pred_fallthru
      _
    // Predicated region
    $region14: #{tpu_custom_call.1} parent=1 // pred_check
      _
    $region15: #{tpu_custom_call.1} parent=1 // pred_check_branch
      %52 = sbr.rel (0) target = $region17
    $region16: #{tpu_custom_call.1} parent=1 // pred_region
      %54 = vsyncadd [#allocation9], 0
      %s55 = sshll.u32 %s3, 4
      %s56 = int_to_ptr.hbm [resolvable:$true] %s55
      %s57 = sshll.u32 [#allocation8], 4
      %s58 = int_to_ptr.vmem [resolvable:$true] %s57
      %63 = dma.hbm_to_vmem [thread:$0]  %s56, 1024, %s58, [#allocation9], 256, 256, 16
    $region17: #{tpu_custom_call.1} parent=1 // pred_fallthru
      _
    // Predicated region
    $region18: #{tpu_custom_call.1} parent=1 // pred_check
      _
    $region19: #{tpu_custom_call.1} parent=1 // pred_check_branch
      %65 = sbr.rel (0) target = $region21
    $region20: #{tpu_custom_call.1} parent=1 // pred_region
      _
    $region21: #{tpu_custom_call.1} parent=1 // pred_fallthru
      _
    // Predicated region
    $region22: #{tpu_custom_call.1} parent=1 // pred_check
      _
    $region23: #{tpu_custom_call.1} parent=1 // pred_check_branch
      %67 = sbr.rel (0) target = $region25
    $region24: #{tpu_custom_call.1} parent=1 // pred_region
      %69 = dma.done [#allocation3], 128
    $region25: #{tpu_custom_call.1} parent=1 // pred_fallthru
      _
    // Predicated region
    $region26: #{tpu_custom_call.1} parent=1 // pred_check
      _
    $region27: #{tpu_custom_call.1} parent=1 // pred_check_branch
      %71 = sbr.rel (0) target = $region29
    $region28: #{tpu_custom_call.1} parent=1 // pred_region
      %73 = dma.done [#allocation6], 4096
    $region29: #{tpu_custom_call.1} parent=1 // pred_fallthru
      _
    // Predicated region
    $region30: #{tpu_custom_call.1} parent=1 // pred_check
      _
    $region31: #{tpu_custom_call.1} parent=1 // pred_check_branch
      %75 = sbr.rel (0) target = $region33
    $region32: #{tpu_custom_call.1} parent=1 // pred_region
      %77 = dma.done [#allocation6], 128
    $region33: #{tpu_custom_call.1} parent=1 // pred_fallthru
      _
    // Predicated region
    $region34: #{tpu_custom_call.1} parent=1 // pred_check
      _
    $region35: #{tpu_custom_call.1} parent=1 // pred_check_branch
      %79 = sbr.rel (0) target = $region37
    $region36: #{tpu_custom_call.1} parent=1 // pred_region
      %81 = dma.done [#allocation9], 1024
    $region37: #{tpu_custom_call.1} parent=1 // pred_fallthru
      _
    %v82 = vld [vmem:[#allocation2] sm:$0xff]
    %v83 = vmul.f32 %v82, %v82
    %vm84 = vcmask 261120
    %v85 = vsel %vm84, %v83, 0.0
    %86 = vadd.xlane.f32.xlu0 %v85
    %v87 = vpop.xlane.xlu0 %86
    %v88 = vrsqrt.pop %v87
    %v89 = vmul.f32 %v88, %v87
    %v90 = vmul.f32 %v89, %v88
    %v91 = vmul.f32 0.5, %v90
    %v92 = vsub.f32 1.5, %v91
    %v93 = vmul.f32 %v88, %v92
    %v94 = vmul.f32 %v87, %v93
    %vm95 = vcmp.eq.f32.partialorder %v87, inf
    %v96 = vsel %vm95, %v87, %v94
    %vm97 = vcmp.eq.f32.partialorder %v87, 0.0
    %v98 = vand.u32 %v87, 2147483648
    %v99 = vsel %vm97, %v98, %v96
    %v100 = vmax.f32 %v99, 1e-12
    %v101 = vrcp.pop %v100
    %v102 = vmul.f32 %v100, %v101
    %v103 = vsub.f32 1.0, %v102
    %v104 = vmul.f32 %v101, %v103
    %v105 = vadd.f32 %v101, %v104
    %vm106 = vweird.f32 %v100
    %vm107 = vweird.f32 %v101
    %vm108 = vmor %vm106, %vm107
    %v109 = vsel %vm108, %v101, %v105
    %v110 = vand.u32 2147483647, %v100
    %vm111 = vcmp.eq.f32.partialorder %v110, 8.507059e+37
    %v112 = vand.u32 %v100, 2147483648
    %v113 = vor.u32 1.1754944e-38, %v112
    %v114 = vsel %vm111, %v113, %v109
    %v115 = vmul.f32 %v82, %v114
    %v116 = vld [vmem:[#allocation5] sm:$0xff]
    %v117 = vld [vmem:[#allocation5 + $0x8] sm:$0xff]
    %v118 = vld [vmem:[#allocation5 + $0x10] sm:$0xff]
    %v119 = vld [vmem:[#allocation5 + $0x18] sm:$0xff]
    %v120 = vld [vmem:[#allocation7] sm:$0x1]
    %v122 = vperm.slane %v120, 0
    %v125 = vsel %vm84, %v115, 0
    %127 = vmatpush.msra.mxu0 0.0
    %128 = vmatpush.msra.mxu0 0.0
    %129 = vmatpush.msra.mxu0 0.0
    %130 = vmatpush.msra.mxu0 0.0
    %131 = vmatpush.msra.mxu0 0.0
    %132 = vmatpush.msra.mxu0 0.0
    %133 = vmatpush.msra.mxu0 0.0
    %134 = vmatpush.msra.mxu0 0.0
    %135 = vmatpush.msra.mxu0 0.0
    %136 = vmatpush.msra.mxu0 0.0
    %137 = vmatpush.msra.mxu0 0.0
    %138 = vmatpush.msra.mxu0 0.0
    %139 = vmatpush.msra.mxu0 %v119
    %140 = vmatpush.msra.mxu0 %v118
    %141 = vmatpush.msra.mxu0 %v117
    %142 = vmatpush.msra.mxu0 %v116
    %143 = vmatmul.f32.gmra.mxu0 %v125
    %v144 = vpop.f32.mrf.mxu0
    %v145 = vadd.f32 %v122, %v144
    %146 = vdwg.mxu0
    %vm147 = vcmp.gt.f32.partialorder %v145, 0.0
    %v148 = vmul.f32 %v145, 0.2
    %v149 = vsel %vm147, %v145, %v148
    %s150 = scalar_lea.vmem [#allocation5], 32
    %v151 = vld [vmem:[%s150] sm:$0xff]
    %v152 = vld [vmem:[%s150 + $0x8] sm:$0xff]
    %v153 = vld [vmem:[%s150 + $0x10] sm:$0xff]
    %v154 = vld [vmem:[%s150 + $0x18] sm:$0xff]
    %s155 = scalar_lea.vmem [#allocation7], 1
    %v156 = vld [vmem:[%s155] sm:$0x1]
    %v158 = vperm.slane %v156, 0
    %v161 = vsel %vm84, %v149, 0
    %163 = vmatpush.msra.mxu0 0.0
    %164 = vmatpush.msra.mxu0 0.0
    %165 = vmatpush.msra.mxu0 0.0
    %166 = vmatpush.msra.mxu0 0.0
    %167 = vmatpush.msra.mxu0 0.0
    %168 = vmatpush.msra.mxu0 0.0
    %169 = vmatpush.msra.mxu0 0.0
    %170 = vmatpush.msra.mxu0 0.0
    %171 = vmatpush.msra.mxu0 0.0
    %172 = vmatpush.msra.mxu0 0.0
    %173 = vmatpush.msra.mxu0 0.0
    %174 = vmatpush.msra.mxu0 0.0
    %175 = vmatpush.msra.mxu0 %v154
    %176 = vmatpush.msra.mxu0 %v153
    %177 = vmatpush.msra.mxu0 %v152
    %178 = vmatpush.msra.mxu0 %v151
    %179 = vmatmul.f32.gmra.mxu0 %v161
    %v180 = vpop.f32.mrf.mxu0
    %v181 = vadd.f32 %v158, %v180
    %182 = vdwg.mxu0
    %vm183 = vcmp.gt.f32.partialorder %v181, 0.0
    %v184 = vmul.f32 %v181, 0.2
    %v185 = vsel %vm183, %v181, %v184
    %s186 = scalar_lea.vmem [#allocation5], 64
    %v187 = vld [vmem:[%s186] sm:$0xff]
    %v188 = vld [vmem:[%s186 + $0x8] sm:$0xff]
    %v189 = vld [vmem:[%s186 + $0x10] sm:$0xff]
    %v190 = vld [vmem:[%s186 + $0x18] sm:$0xff]
    %s191 = scalar_lea.vmem [#allocation7], 2
    %v192 = vld [vmem:[%s191] sm:$0x1]
    %v194 = vperm.slane %v192, 0
    %v197 = vsel %vm84, %v185, 0
    %199 = vmatpush.msra.mxu0 0.0
    %200 = vmatpush.msra.mxu0 0.0
    %201 = vmatpush.msra.mxu0 0.0
    %202 = vmatpush.msra.mxu0 0.0
    %203 = vmatpush.msra.mxu0 0.0
    %204 = vmatpush.msra.mxu0 0.0
    %205 = vmatpush.msra.mxu0 0.0
    %206 = vmatpush.msra.mxu0 0.0
    %207 = vmatpush.msra.mxu0 0.0
    %208 = vmatpush.msra.mxu0 0.0
    %209 = vmatpush.msra.mxu0 0.0
    %210 = vmatpush.msra.mxu0 0.0
    %211 = vmatpush.msra.mxu0 %v190
    %212 = vmatpush.msra.mxu0 %v189
    %213 = vmatpush.msra.mxu0 %v188
    %214 = vmatpush.msra.mxu0 %v187
    %215 = vmatmul.f32.gmra.mxu0 %v197
    %v216 = vpop.f32.mrf.mxu0
    %v217 = vadd.f32 %v194, %v216
    %218 = vdwg.mxu0
    %vm219 = vcmp.gt.f32.partialorder %v217, 0.0
    %v220 = vmul.f32 %v217, 0.2
    %v221 = vsel %vm219, %v217, %v220
    %s222 = scalar_lea.vmem [#allocation5], 96
    %v223 = vld [vmem:[%s222] sm:$0xff]
    %v224 = vld [vmem:[%s222 + $0x8] sm:$0xff]
    %v225 = vld [vmem:[%s222 + $0x10] sm:$0xff]
    %v226 = vld [vmem:[%s222 + $0x18] sm:$0xff]
    %s227 = scalar_lea.vmem [#allocation7], 3
    %v228 = vld [vmem:[%s227] sm:$0x1]
    %v230 = vperm.slane %v228, 0
    %v233 = vsel %vm84, %v221, 0
    %235 = vmatpush.msra.mxu0 0.0
    %236 = vmatpush.msra.mxu0 0.0
    %237 = vmatpush.msra.mxu0 0.0
    %238 = vmatpush.msra.mxu0 0.0
    %239 = vmatpush.msra.mxu0 0.0
    %240 = vmatpush.msra.mxu0 0.0
    %241 = vmatpush.msra.mxu0 0.0
    %242 = vmatpush.msra.mxu0 0.0
    %243 = vmatpush.msra.mxu0 0.0
    %244 = vmatpush.msra.mxu0 0.0
    %245 = vmatpush.msra.mxu0 0.0
    %246 = vmatpush.msra.mxu0 0.0
    %247 = vmatpush.msra.mxu0 %v226
    %248 = vmatpush.msra.mxu0 %v225
    %249 = vmatpush.msra.mxu0 %v224
    %250 = vmatpush.msra.mxu0 %v223
    %251 = vmatmul.f32.gmra.mxu0 %v233
    %v252 = vpop.f32.mrf.mxu0
    %v253 = vadd.f32 %v230, %v252
    %254 = vdwg.mxu0
    %vm255 = vcmp.gt.f32.partialorder %v253, 0.0
    %v256 = vmul.f32 %v253, 0.2
    %v257 = vsel %vm255, %v253, %v256
    %s258 = scalar_lea.vmem [#allocation5], 128
    %v259 = vld [vmem:[%s258] sm:$0xff]
    %v260 = vld [vmem:[%s258 + $0x8] sm:$0xff]
    %v261 = vld [vmem:[%s258 + $0x10] sm:$0xff]
    %v262 = vld [vmem:[%s258 + $0x18] sm:$0xff]
    %s263 = scalar_lea.vmem [#allocation7], 4
    %v264 = vld [vmem:[%s263] sm:$0x1]
    %v266 = vperm.slane %v264, 0
    %v269 = vsel %vm84, %v257, 0
    %271 = vmatpush.msra.mxu0 0.0
    %272 = vmatpush.msra.mxu0 0.0
    %273 = vmatpush.msra.mxu0 0.0
    %274 = vmatpush.msra.mxu0 0.0
    %275 = vmatpush.msra.mxu0 0.0
    %276 = vmatpush.msra.mxu0 0.0
    %277 = vmatpush.msra.mxu0 0.0
    %278 = vmatpush.msra.mxu0 0.0
    %279 = vmatpush.msra.mxu0 0.0
    %280 = vmatpush.msra.mxu0 0.0
    %281 = vmatpush.msra.mxu0 0.0
    %282 = vmatpush.msra.mxu0 0.0
    %283 = vmatpush.msra.mxu0 %v262
    %284 = vmatpush.msra.mxu0 %v261
    %285 = vmatpush.msra.mxu0 %v260
    %286 = vmatpush.msra.mxu0 %v259
    %287 = vmatmul.f32.gmra.mxu0 %v269
    %v288 = vpop.f32.mrf.mxu0
    %v289 = vadd.f32 %v266, %v288
    %290 = vdwg.mxu0
    %vm291 = vcmp.gt.f32.partialorder %v289, 0.0
    %v292 = vmul.f32 %v289, 0.2
    %v293 = vsel %vm291, %v289, %v292
    %s294 = scalar_lea.vmem [#allocation5], 160
    %v295 = vld [vmem:[%s294] sm:$0xff]
    %v296 = vld [vmem:[%s294 + $0x8] sm:$0xff]
    %v297 = vld [vmem:[%s294 + $0x10] sm:$0xff]
    %v298 = vld [vmem:[%s294 + $0x18] sm:$0xff]
    %s299 = scalar_lea.vmem [#allocation7], 5
    %v300 = vld [vmem:[%s299] sm:$0x1]
    %v302 = vperm.slane %v300, 0
    %v305 = vsel %vm84, %v293, 0
    %307 = vmatpush.msra.mxu0 0.0
    %308 = vmatpush.msra.mxu0 0.0
    %309 = vmatpush.msra.mxu0 0.0
    %310 = vmatpush.msra.mxu0 0.0
    %311 = vmatpush.msra.mxu0 0.0
    %312 = vmatpush.msra.mxu0 0.0
    %313 = vmatpush.msra.mxu0 0.0
    %314 = vmatpush.msra.mxu0 0.0
    %315 = vmatpush.msra.mxu0 0.0
    %316 = vmatpush.msra.mxu0 0.0
    %317 = vmatpush.msra.mxu0 0.0
    %318 = vmatpush.msra.mxu0 0.0
    %319 = vmatpush.msra.mxu0 %v298
    %320 = vmatpush.msra.mxu0 %v297
    %321 = vmatpush.msra.mxu0 %v296
    %322 = vmatpush.msra.mxu0 %v295
    %323 = vmatmul.f32.gmra.mxu0 %v305
    %v324 = vpop.f32.mrf.mxu0
    %v325 = vadd.f32 %v302, %v324
    %326 = vdwg.mxu0
    %vm327 = vcmp.gt.f32.partialorder %v325, 0.0
    %v328 = vmul.f32 %v325, 0.2
    %v329 = vsel %vm327, %v325, %v328
    %s330 = scalar_lea.vmem [#allocation5], 192
    %v331 = vld [vmem:[%s330] sm:$0xff]
    %v332 = vld [vmem:[%s330 + $0x8] sm:$0xff]
    %v333 = vld [vmem:[%s330 + $0x10] sm:$0xff]
    %v334 = vld [vmem:[%s330 + $0x18] sm:$0xff]
    %s335 = scalar_lea.vmem [#allocation7], 6
    %v336 = vld [vmem:[%s335] sm:$0x1]
    %v338 = vperm.slane %v336, 0
    %v341 = vsel %vm84, %v329, 0
    %343 = vmatpush.msra.mxu0 0.0
    %344 = vmatpush.msra.mxu0 0.0
    %345 = vmatpush.msra.mxu0 0.0
    %346 = vmatpush.msra.mxu0 0.0
    %347 = vmatpush.msra.mxu0 0.0
    %348 = vmatpush.msra.mxu0 0.0
    %349 = vmatpush.msra.mxu0 0.0
    %350 = vmatpush.msra.mxu0 0.0
    %351 = vmatpush.msra.mxu0 0.0
    %352 = vmatpush.msra.mxu0 0.0
    %353 = vmatpush.msra.mxu0 0.0
    %354 = vmatpush.msra.mxu0 0.0
    %355 = vmatpush.msra.mxu0 %v334
    %356 = vmatpush.msra.mxu0 %v333
    %357 = vmatpush.msra.mxu0 %v332
    %358 = vmatpush.msra.mxu0 %v331
    %359 = vmatmul.f32.gmra.mxu0 %v341
    %v360 = vpop.f32.mrf.mxu0
    %v361 = vadd.f32 %v338, %v360
    %362 = vdwg.mxu0
    %vm363 = vcmp.gt.f32.partialorder %v361, 0.0
    %v364 = vmul.f32 %v361, 0.2
    %v365 = vsel %vm363, %v361, %v364
    %s366 = scalar_lea.vmem [#allocation5], 224
    %v367 = vld [vmem:[%s366] sm:$0xff]
    %v368 = vld [vmem:[%s366 + $0x8] sm:$0xff]
    %v369 = vld [vmem:[%s366 + $0x10] sm:$0xff]
    %v370 = vld [vmem:[%s366 + $0x18] sm:$0xff]
    %s371 = scalar_lea.vmem [#allocation7], 7
    %v372 = vld [vmem:[%s371] sm:$0x1]
    %v374 = vperm.slane %v372, 0
    %v377 = vsel %vm84, %v365, 0
    %379 = vmatpush.msra.mxu0 0.0
    %380 = vmatpush.msra.mxu0 0.0
    %381 = vmatpush.msra.mxu0 0.0
    %382 = vmatpush.msra.mxu0 0.0
    %383 = vmatpush.msra.mxu0 0.0
    %384 = vmatpush.msra.mxu0 0.0
    %385 = vmatpush.msra.mxu0 0.0
    %386 = vmatpush.msra.mxu0 0.0
    %387 = vmatpush.msra.mxu0 0.0
    %388 = vmatpush.msra.mxu0 0.0
    %389 = vmatpush.msra.mxu0 0.0
    %390 = vmatpush.msra.mxu0 0.0
    %391 = vmatpush.msra.mxu0 %v370
    %392 = vmatpush.msra.mxu0 %v369
    %393 = vmatpush.msra.mxu0 %v368
    %394 = vmatpush.msra.mxu0 %v367
    %395 = vmatmul.f32.gmra.mxu0 %v377
    %v396 = vpop.f32.mrf.mxu0
    %v397 = vadd.f32 %v374, %v396
    %398 = vdwg.mxu0
    %vm399 = vcmp.gt.f32.partialorder %v397, 0.0
    %v400 = vmul.f32 %v397, 0.2
    %v401 = vsel %vm399, %v397, %v400
    %v402 = vld [vmem:[#allocation8] sm:$0xff]
    %v403 = vld [vmem:[#allocation8 + $0x8] sm:$0xff]
    %v404 = vld [vmem:[#allocation8 + $0x10] sm:$0xff]
    %v405 = vld [vmem:[#allocation8 + $0x18] sm:$0xff]
    %v406 = vld [vmem:[#allocation8 + $0x20] sm:$0xff]
    %v407 = vld [vmem:[#allocation8 + $0x28] sm:$0xff]
    %v408 = vld [vmem:[#allocation8 + $0x30] sm:$0xff]
    %v409 = vld [vmem:[#allocation8 + $0x38] sm:$0xff]
    %v410 = vld [vmem:[%s4] sm:$0x3]
    %v412 = vperm.slane %v410, 0
    %v413 = vperm.slane %v410, 1
    %v417 = vsel %vm84, %v401, 0
    %419 = vmatpush.msra.mxu0 0.0
    %420 = vmatpush.msra.mxu0 0.0
    %421 = vmatpush.msra.mxu0 0.0
    %422 = vmatpush.msra.mxu0 0.0
    %423 = vmatpush.msra.mxu0 0.0
    %424 = vmatpush.msra.mxu0 0.0
    %425 = vmatpush.msra.mxu0 0.0
    %426 = vmatpush.msra.mxu0 0.0
    %427 = vmatpush.msra.mxu0 0.0
    %428 = vmatpush.msra.mxu0 0.0
    %429 = vmatpush.msra.mxu0 0.0
    %430 = vmatpush.msra.mxu0 0.0
    %431 = vmatpush.msra.mxu0 %v408
    %432 = vmatpush.msra.mxu0 %v406
    %433 = vmatpush.msra.mxu0 %v404
    %434 = vmatpush.msra.mxu0 %v402
    %435 = vmatmul.f32.gmra.mxu0 %v417
    %v436 = vpop.f32.mrf.mxu0
    %v437 = vadd.f32 %v412, %v436
    %438 = vdwg.mxu0
    %439 = vmatpush.msra.mxu0 0.0
    %440 = vmatpush.msra.mxu0 0.0
    %441 = vmatpush.msra.mxu0 0.0
    %442 = vmatpush.msra.mxu0 0.0
    %443 = vmatpush.msra.mxu0 0.0
    %444 = vmatpush.msra.mxu0 0.0
    %445 = vmatpush.msra.mxu0 0.0
    %446 = vmatpush.msra.mxu0 0.0
    %447 = vmatpush.msra.mxu0 0.0
    %448 = vmatpush.msra.mxu0 0.0
    %449 = vmatpush.msra.mxu0 0.0
    %450 = vmatpush.msra.mxu0 0.0
    %451 = vmatpush.msra.mxu0 %v409
    %452 = vmatpush.msra.mxu0 %v407
    %453 = vmatpush.msra.mxu0 %v405
    %454 = vmatpush.msra.mxu0 %v403
    %455 = vmatmul.f32.gmra.mxu0 %v417
    %v456 = vpop.f32.mrf.mxu0
    %v457 = vadd.f32 %v413, %v456
    %458 = vdwg.mxu0
    %vm459 = vcmp.gt.f32.partialorder %v437, 0.0
    %vm460 = vcmp.gt.f32.partialorder %v457, 0.0
    %v461 = vmul.f32 %v437, 0.2
    %v462 = vmul.f32 %v457, 0.2
    %v463 = vsel %vm459, %v437, %v461
    %v464 = vsel %vm460, %v457, %v462
    %465 = vst [vmem:[#allocation10] sm:$0xff] %v463
    %466 = vst [vmem:[#allocation10 + $0x8] sm:$0xff] %v464
    // Predicated region
    $region38: #{tpu_custom_call.1} parent=1 // pred_check
      _
    $region39: #{tpu_custom_call.1} parent=1 // pred_check_branch
      %468 = sbr.rel (0) target = $region41
    $region40: #{tpu_custom_call.1} parent=1 // pred_region
      %470 = vsyncadd [#allocation4], 0
      %s472 = sshll.u32 [#allocation10], 4
      %s473 = int_to_ptr.vmem [resolvable:$true] %s472
      %s474 = sshll.u32 %s5, 4
      %s475 = int_to_ptr.hbm [resolvable:$true] %s474
      %477 = dma.vmem_to_hbm [thread:$0]  %s473, 256, %s475, [#allocation4]
    $region41: #{tpu_custom_call.1} parent=1 // pred_fallthru
      _
    // Predicated region
    $region42: #{tpu_custom_call.1} parent=1 // pred_check
      _
    $region43: #{tpu_custom_call.1} parent=1 // pred_check_branch
      %479 = sbr.rel (0) target = $region45
    $region44: #{tpu_custom_call.1} parent=1 // pred_region
      %481 = dma.done [#allocation4], 256
    $region45: #{tpu_custom_call.1} parent=1 // pred_fallthru
      _
    %482 = vsyncpa [#allocation3], 1
    %483 = vsyncpa [#allocation6], 1
    %484 = vsyncpa [#allocation9], 1
    %485 = vsyncpa [#allocation4], 1

</llo_original>
